<compile_context>
chip_gen: v5e
topology: v5e:2x2
jax: 0.10.0
libtpu: 0.0.40
codegen_flags: <defaults>
</compile_context>

<pallas_src>
import functools

import jax
import jax.numpy as jnp
from jax import lax
from jax.experimental import pallas as pl
from jax.experimental.pallas import tpu as pltpu


def _round_up(n: int, m: int) -> int:
    return (n + m - 1) // m * m


def _critic_kernel(x_ref, p_ref, o_ref, *, state_dim, sd_p, c, r_vec,
                   matmul_dtype):
    """One batch tile: x (tb, state_dim) -> values (1, tb) (batch on lanes)."""
    # Static views into the resident parameter slab.
    w1 = p_ref[0:state_dim, :]            # (state_dim, c)  W1 (cols zero-padded)
    w2 = p_ref[sd_p:sd_p + c, :]          # (c, c)          W2 (zero-padded)
    b1 = p_ref[r_vec + 0:r_vec + 1, :]    # (1, c)
    b2 = p_ref[r_vec + 1:r_vec + 2, :]    # (1, c)
    w3 = p_ref[r_vec + 2:r_vec + 3, :]    # (1, c)          head weights as a row
    b3 = p_ref[r_vec + 3:r_vec + 4, 0:1]  # (1, 1)          head bias

    x = x_ref[...]
    md = jnp.float32 if matmul_dtype is None else matmul_dtype

    def mxu(a, b, dn=None):
        a = a.astype(md)
        b = b.astype(md)
        if dn is None:
            return jnp.dot(a, b, preferred_element_type=jnp.float32)
        return lax.dot_general(a, b, dn, preferred_element_type=jnp.float32)

    # Hidden layers: matmuls on the MXU (bf16 operands by default), bias-add +
    # ReLU in f32 on the VPU.  Columns >= h1/h2 stay exactly zero because the
    # padded weight columns / bias lanes are zero, so the padded math is exact.
    h = jnp.maximum(mxu(x, w1) + b1, 0.0)     # (tb, c)
    h = jnp.maximum(mxu(h, w2) + b2, 0.0)     # (tb, c)

    # Head Linear(h2, 1): contract the last dims of (1, c) and (tb, c) - the
    # standard flash-attention q.k^T pattern (no XLU transpose of the big
    # operand) - producing (1, tb): batch on lanes => dense, unmasked store.
    v = mxu(w3, h, dn=(((1,), (1,)), ((), ())))   # (1, tb)
    o_ref[...] = (v + b3).astype(o_ref.dtype)


def pack_critic_params(w1, b1, w2, b2, w3, b3):
    """One-time packing of the 6 parameter tensors into a single padded slab.

    Slab layout (width c = max(round_up(h1,128), round_up(h2,128)), f32):
      rows [0, sd_p)         : W1   (real data in [:state_dim, :h1])
      rows [sd_p, sd_p + c)  : W2   (real data in [:h1, :h2])
      row  r_vec + 0         : b1   (first h1 lanes)
      row  r_vec + 1         : b2   (first h2 lanes)
      row  r_vec + 2         : W3 as a row (first h2 lanes)
      row  r_vec + 3, lane 0 : b3
    Zero padding everywhere else keeps the padded matmuls mathematically exact.
    """
    state_dim, h1 = w1.shape
    h2 = w2.shape[1]
    sd_p = _round_up(state_dim, 8)
    c = max(_round_up(h1, 128), _round_up(h2, 128))
    r_vec = sd_p + c
    rows = _round_up(r_vec + 4, 8)

    slab = jnp.zeros((rows, c), jnp.float32)
    slab = slab.at[:state_dim, :h1].set(w1.astype(jnp.float32))
    slab = slab.at[sd_p:sd_p + h1, :h2].set(w2.astype(jnp.float32))
    slab = slab.at[r_vec + 0, :h1].set(b1.reshape(-1).astype(jnp.float32))
    slab = slab.at[r_vec + 1, :h2].set(b2.reshape(-1).astype(jnp.float32))
    slab = slab.at[r_vec + 2, :h2].set(w3.reshape(-1).astype(jnp.float32))
    slab = slab.at[r_vec + 3, 0].set(jnp.asarray(b3, jnp.float32).reshape(()))
    meta = dict(state_dim=state_dim, sd_p=sd_p, c=c, r_vec=r_vec)
    return slab, meta


def critic_net_forward(x, packed_params, *, block_batch=2048,
                       matmul_dtype=jnp.bfloat16, vmem_limit_bytes="auto"):
    """Pallas-backed CriticNet forward.  Returns value estimates, shape (batch,).

    x may be f32 or bf16 (bf16 halves the HBM read).  matmul_dtype controls the
    MXU operand dtype (default bf16; None = exact f32).  block_batch caps the
    per-grid-step batch tile (multiple of 128); 4096-8192 can pay off on
    v6e/v7x for very large batches.
    """
    slab, meta = packed_params
    state_dim, sd_p, c, r_vec = (meta["state_dim"], meta["sd_p"],
                                 meta["c"], meta["r_vec"])
    if x.ndim != 2 or x.shape[1] != state_dim:
        raise ValueError(f"expected x of shape (batch, {state_dim}), got {x.shape}")
    if block_batch % 128 != 0:
        raise ValueError("block_batch must be a multiple of 128")

    batch = x.shape[0]
    if batch <= 128:
        # Single exact tile (block dims equal the full array dims).
        tb = batch
    else:
        # Multiple of 128 (lane-aligned output blocks); at least 2 tiles so
        # ("parallel",) can shard across v7x's two TensorCores; capped at
        # block_batch to bound per-step VMEM.
        tb = min(block_batch, max(128, _round_up(pl.cdiv(batch, 2), 128)))
    num_tiles = pl.cdiv(batch, tb)

    kernel = functools.partial(_critic_kernel, state_dim=state_dim, sd_p=sd_p,
                               c=c, r_vec=r_vec, matmul_dtype=matmul_dtype)

    compiler_kwargs = dict(dimension_semantics=("parallel",))
    if vmem_limit_bytes == "auto":
        # Conservative per-step VMEM estimate: double-buffered x tile + resident
        # slab + output + live f32 intermediates.  Only override the scoped
        # default when the estimate threatens v5e's 16 MiB default.
        est = (2 * tb * state_dim * x.dtype.itemsize
               + 2 * slab.size * 4
               + 2 * tb * 4
               + 6 * tb * c * 4)
        if est > 14 * (1 << 20):
            compiler_kwargs["vmem_limit_bytes"] = int(min(est * 1.25, 32 << 20))
    elif vmem_limit_bytes is not None:
        compiler_kwargs["vmem_limit_bytes"] = int(vmem_limit_bytes)

    out = pl.pallas_call(
        kernel,
        out_shape=jax.ShapeDtypeStruct((1, batch), jnp.float32),
        grid=(num_tiles,),
        in_specs=[
            # Batch tile of x: pipelined / double-buffered across grid steps.
            # Ragged last tile handled by Pallas partial blocks (rows are
            # independent; invalid output lanes are masked on store).
            pl.BlockSpec((tb, state_dim), lambda i: (i, 0)),
            # Packed parameters: constant block index -> DMA'd once, resident.
            pl.BlockSpec(slab.shape, lambda i: (0, 0)),
        ],
        # Lane-dense values: batch lives on the 128-lane axis.
        out_specs=pl.BlockSpec((1, tb), lambda i: (0, i)),
        compiler_params=pltpu.CompilerParams(**compiler_kwargs),
    )(x, slab)

    # forward(x) = self.model(x)[:, 0]
    return out[0]


def init_params(key, state_dim, hidden_sizes):
    """Deterministic synthetic init (uniform, like torch.nn.Linear default bounds)."""
    dims = [state_dim] + list(hidden_sizes) + [1]
    params = []
    for i in range(len(dims) - 1):
        fan_in, fan_out = dims[i], dims[i + 1]
        key, kw, kb = jax.random.split(key, 3)
        bound = 1.0 / (fan_in ** 0.5)
        w = jax.random.uniform(kw, (fan_in, fan_out), jnp.float32, -bound, bound)
        b = jax.random.uniform(kb, (1, fan_out), jnp.float32, -bound, bound)
        params.extend([w, b])
    return tuple(params)


def _reference_forward(x, params):
    w1, b1, w2, b2, w3, b3 = params
    h = jnp.maximum(x @ w1 + b1, 0.0)
    h = jnp.maximum(h @ w2 + b2, 0.0)
    return (h @ w3 + b3)[:, 0]


if __name__ == "__main__":
    key = jax.random.PRNGKey(0)

    # Small shapes consistent with the module.
    batch, state_dim, hidden_sizes = 8, 16, (32, 32)
    key, kx = jax.random.split(key)
    x = jax.random.normal(kx, (batch, state_dim), jnp.float32)
    params = init_params(key, state_dim, hidden_sizes)
    packed = pack_critic_params(*params)
    ref = _reference_forward(x, params)

    # Default path: bf16 MXU operands, single exact tile (batch <= 128).
    values = jax.block_until_ready(critic_net_forward(x, packed))
    assert values.shape == (batch,)
    assert jnp.allclose(values, ref, atol=5e-2, rtol=5e-2), \
        float(jnp.max(jnp.abs(values - ref)))

    # Exact f32 path, tight tolerance against the reference.
    values_f32 = jax.block_until_ready(
        critic_net_forward(x, packed, matmul_dtype=None))
    assert jnp.allclose(values_f32, ref, atol=1e-4, rtol=1e-4), \
        float(jnp.max(jnp.abs(values_f32 - ref)))

    # Multi-tile ragged batch (2 tiles, partial last tile, no wrapper pad),
    # exact f32 path.
    batch2 = 300
    key, kx2 = jax.random.split(key)
    x2 = jax.random.normal(kx2, (batch2, state_dim), jnp.float32)
    ref2 = _reference_forward(x2, params)
    values2 = jax.block_until_ready(
        critic_net_forward(x2, packed, matmul_dtype=None))
    assert values2.shape == (batch2,)
    assert jnp.allclose(values2, ref2, atol=1e-4, rtol=1e-4), \
        float(jnp.max(jnp.abs(values2 - ref2)))

    # Multi-tile (3 tiles) bf16 MXU path with a forced small tile and bf16 x
    # in HBM (halves the x DMA); compare against a reference built from the
    # same bf16-quantized x so only MXU rounding differs.
    x2_bf16 = x2.astype(jnp.bfloat16)
    ref2_b = _reference_forward(x2_bf16.astype(jnp.float32), params)
    values3 = jax.block_until_ready(
        critic_net_forward(x2_bf16, packed, block_batch=128))
    assert values3.shape == (batch2,)
    assert jnp.allclose(values3, ref2_b, atol=5e-2, rtol=5e-2), \
        float(jnp.max(jnp.abs(values3 - ref2_b)))

    print("KERNEL_OK")
</pallas_src>

<mosaic_0001>
module attributes {stable_mosaic.version = 11 : i64} {
  func.func @_critic_kernel(%arg0: i32, %arg1: memref<8x16xf32, #tpu.memory_space<vmem>>, %arg2: memref<152x128xf32, #tpu.memory_space<vmem>>, %arg3: memref<1x8xf32, #tpu.memory_space<vmem>>) attributes {dimension_semantics = [#tpu.dimension_semantics<parallel>], iteration_bounds = array<i64: 1>, scalar_prefetch = 0 : i64, scratch_operands = 0 : i64, tpu.core_type = #tpu.core_type<tc>, window_params = [{transform_indices = @transform_0, window_bounds = array<i64: 8, 16>}, {pipeline_mode = #tpu.pipeline_mode<synchronous>, transform_indices = @transform_1, window_bounds = array<i64: 152, 128>}, {transform_indices = @transform_2, window_bounds = array<i64: 1, 8>}]} {
    %c0 = arith.constant 0 : index
    %c0_0 = arith.constant 0 : index
    %0 = vector.load %arg2[%c0, %c0_0] : memref<152x128xf32, #tpu.memory_space<vmem>>, vector<16x128xf32>
    %c16 = arith.constant 16 : index
    %c0_1 = arith.constant 0 : index
    %1 = vector.load %arg2[%c16, %c0_1] : memref<152x128xf32, #tpu.memory_space<vmem>>, vector<128x128xf32>
    %c144 = arith.constant 144 : index
    %c0_2 = arith.constant 0 : index
    %2 = vector.load %arg2[%c144, %c0_2] : memref<152x128xf32, #tpu.memory_space<vmem>>, vector<1x128xf32>
    %c145 = arith.constant 145 : index
    %c0_3 = arith.constant 0 : index
    %3 = vector.load %arg2[%c145, %c0_3] : memref<152x128xf32, #tpu.memory_space<vmem>>, vector<1x128xf32>
    %c146 = arith.constant 146 : index
    %c0_4 = arith.constant 0 : index
    %4 = vector.load %arg2[%c146, %c0_4] : memref<152x128xf32, #tpu.memory_space<vmem>>, vector<1x128xf32>
    %c147 = arith.constant 147 : index
    %c0_5 = arith.constant 0 : index
    %5 = vector.load %arg2[%c147, %c0_5] : memref<152x128xf32, #tpu.memory_space<vmem>>, vector<1x1xf32>
    %c0_6 = arith.constant 0 : index
    %c0_7 = arith.constant 0 : index
    %6 = vector.load %arg1[%c0_6, %c0_7] : memref<8x16xf32, #tpu.memory_space<vmem>>, vector<8x16xf32>
    %7 = arith.truncf %6 : vector<8x16xf32> to vector<8x16xbf16>
    %8 = arith.truncf %0 : vector<16x128xf32> to vector<16x128xbf16>
    %cst = arith.constant dense<0.000000e+00> : vector<8x128xf32>
    %9 = tpu.matmul %7, %8, %cst {dimension_numbers = #tpu.dot_dimension_numbers<[1], [0], [0], [1], [0, 0, 1, 1], [], []>} : vector<8x16xbf16>, vector<16x128xbf16>, vector<8x128xf32> -> vector<8x128xf32>
    %10 = vector.broadcast %2 : vector<1x128xf32> to vector<8x128xf32>
    %11 = arith.addf %9, %10 : vector<8x128xf32>
    %cst_8 = arith.constant 0.000000e+00 : f32
    %12 = vector.broadcast %cst_8 : f32 to vector<8x128xf32>
    %13 = arith.maximumf %11, %12 : vector<8x128xf32>
    %14 = arith.truncf %13 : vector<8x128xf32> to vector<8x128xbf16>
    %15 = arith.truncf %1 : vector<128x128xf32> to vector<128x128xbf16>
    %cst_9 = arith.constant dense<0.000000e+00> : vector<8x128xf32>
    %16 = tpu.matmul %14, %15, %cst_9 {dimension_numbers = #tpu.dot_dimension_numbers<[1], [0], [0], [1], [0, 0, 1, 1], [], []>} : vector<8x128xbf16>, vector<128x128xbf16>, vector<8x128xf32> -> vector<8x128xf32>
    %17 = vector.broadcast %3 : vector<1x128xf32> to vector<8x128xf32>
    %18 = arith.addf %16, %17 : vector<8x128xf32>
    %cst_10 = arith.constant 0.000000e+00 : f32
    %19 = vector.broadcast %cst_10 : f32 to vector<8x128xf32>
    %20 = arith.maximumf %18, %19 : vector<8x128xf32>
    %21 = arith.truncf %4 : vector<1x128xf32> to vector<1x128xbf16>
    %22 = arith.truncf %20 : vector<8x128xf32> to vector<8x128xbf16>
    %cst_11 = arith.constant dense<0.000000e+00> : vector<1x8xf32>
    %23 = tpu.matmul %21, %22, %cst_11 {dimension_numbers = #tpu.dot_dimension_numbers<[1], [1], [0], [0], [0, 0, 1, 0], [], []>} : vector<1x128xbf16>, vector<8x128xbf16>, vector<1x8xf32> -> vector<1x8xf32>
    %24 = vector.broadcast %5 : vector<1x1xf32> to vector<1x8xf32>
    %25 = arith.addf %23, %24 : vector<1x8xf32>
    %c0_12 = arith.constant 0 : index
    %c0_13 = arith.constant 0 : index
    %26 = vector.load %arg3[%c0_12, %c0_13] : memref<1x8xf32, #tpu.memory_space<vmem>>, vector<1x8xf32>
    tpu.vector_store %arg3[%c0_12, %c0_13], %25 {strides = array<i32>} : memref<1x8xf32, #tpu.memory_space<vmem>>, vector<1x8xf32>,
    return
  }
  func.func @transform_0(%arg0: i32) -> (i32, i32) {
    %c0_i32 = arith.constant 0 : i32
    %c0_i32_0 = arith.constant 0 : i32
    return %arg0, %c0_i32 : i32, i32
  }
  func.func @transform_1(%arg0: i32) -> (i32, i32) {
    %c0_i32 = arith.constant 0 : i32
    %c0_i32_0 = arith.constant 0 : i32
    %c0_i32_1 = arith.constant 0 : i32
    return %c0_i32, %c0_i32_0 : i32, i32
  }
  func.func @transform_2(%arg0: i32) -> (i32, i32) {
    %c0_i32 = arith.constant 0 : i32
    %c0_i32_0 = arith.constant 0 : i32
    return %c0_i32, %arg0 : i32, i32
  }
}

</mosaic_0001>

<llo_original>
// kernel: tpu_custom_call.1
$region0: #{tpu_custom_call.1}
  #allocation0 [shape = 'u32[]', space=smem, size = 0x4, offset = 0x4, fixed_abs, tag = 'smem constant byte address 0x4 - core index']
  #allocation1 [shape = 'u32[72,128]{1,0:T(1,128)}', space=vmem, size = 0x9000, scoped, tag = 'internal scratch']
  %s0 = inlined_call_operand.hbm [shape: f32[8,16], index: 0, kind: input, shape index: {}]
  %s1 = inlined_call_operand.hbm [shape: f32[152,128], index: 1, kind: input, shape index: {}]
  %s2 = inlined_call_operand.hbm [shape: f32[1,8], index: 2, kind: output, shape index: {}]
  %s3 = sld [smem:[#allocation0]]
  $region26: #{tpu_custom_call.1} parent=0
    _
  %s5 = ssub.s32 1, %s3
  %s6 = scalar_select 0, %s5, %s3
  $region1: #{tpu_custom_call.1} parent=0
    #allocation2 [shape = 'u8[4096]{0}', space=vmem, size = 0x1000, scoped, tag = 'input window, operand 0, single buffered']
    #allocation3 [shape = 's32[1]{0}', space=sflag, size = 0x4, scoped, tag = 'scoped memory for tpu_custom_call.1']
    #allocation4 [shape = 's32[1]{0}', space=sflag, size = 0x4, scoped, tag = 'scoped memory for tpu_custom_call.1']
    #allocation5 [shape = 'u8[77824]{0}', space=vmem, size = 0x13000, scoped, tag = 'input window, operand 1, single buffered']
    #allocation6 [shape = 's32[1]{0}', space=sflag, size = 0x4, scoped, tag = 'scoped memory for tpu_custom_call.1']
    #allocation7 [shape = 'u8[512]{0}', space=vmem, size = 0x400, scoped, tag = 'output window, operand 0, single buffered']
    %7 = vsyncpa [#allocation3], 0
    %8 = vsyncpa [#allocation6], 0
    %9 = vsyncpa [#allocation4], 0
    // Predicated region
    $region2: #{tpu_custom_call.1} parent=1 // pred_check
      _
    $region3: #{tpu_custom_call.1} parent=1 // pred_check_branch
      %11 = sbr.rel (0) target = $region5
    $region4: #{tpu_custom_call.1} parent=1 // pred_region
      %13 = vsyncadd [#allocation3], 0
      %s15 = sshll.u32 %s0, 4
      %s16 = int_to_ptr.hbm [resolvable:$true] %s15
      %s17 = sshll.u32 [#allocation2], 4
      %s18 = int_to_ptr.vmem [resolvable:$true] %s17
      %20 = dma.hbm_to_vmem [thread:$0]  %s16, 128, %s18, [#allocation3]
    $region5: #{tpu_custom_call.1} parent=1 // pred_fallthru
      _
    // Predicated region
    $region6: #{tpu_custom_call.1} parent=1 // pred_check
      _
    $region7: #{tpu_custom_call.1} parent=1 // pred_check_branch
      %22 = sbr.rel (0) target = $region9
    $region8: #{tpu_custom_call.1} parent=1 // pred_region
      %24 = vsyncadd [#allocation6], 0
      %s25 = sshll.u32 %s1, 4
      %s26 = int_to_ptr.hbm [resolvable:$true] %s25
      %s27 = sshll.u32 [#allocation5], 4
      %s28 = int_to_ptr.vmem [resolvable:$true] %s27
      %33 = dma.hbm_to_vmem [thread:$0]  %s26, 2432, %s28, [#allocation6], 128, 128, 8
    $region9: #{tpu_custom_call.1} parent=1 // pred_fallthru
      _
    // Predicated region
    $region10: #{tpu_custom_call.1} parent=1 // pred_check
      _
    $region11: #{tpu_custom_call.1} parent=1 // pred_check_branch
      %35 = sbr.rel (0) target = $region13
    $region12: #{tpu_custom_call.1} parent=1 // pred_region
      %37 = dma.done [#allocation3], 128
    $region13: #{tpu_custom_call.1} parent=1 // pred_fallthru
      _
    // Predicated region
    $region14: #{tpu_custom_call.1} parent=1 // pred_check
      _
    $region15: #{tpu_custom_call.1} parent=1 // pred_check_branch
      %39 = sbr.rel (0) target = $region17
    $region16: #{tpu_custom_call.1} parent=1 // pred_region
      %41 = dma.done [#allocation6], 2432
    $region17: #{tpu_custom_call.1} parent=1 // pred_fallthru
      _
    %v43 = vld [vmem:[#allocation5] sm:$0xff]
    %v44 = vld [vmem:[#allocation5 + $0x8] sm:$0xff]
    %v45 = vld [vmem:[#allocation5 + $0x10] sm:$0xff]
    %v46 = vld [vmem:[#allocation5 + $0x18] sm:$0xff]
    %v47 = vld [vmem:[#allocation5 + $0x20] sm:$0xff]
    %v48 = vld [vmem:[#allocation5 + $0x28] sm:$0xff]
    %v49 = vld [vmem:[#allocation5 + $0x30] sm:$0xff]
    %v50 = vld [vmem:[#allocation5 + $0x38] sm:$0xff]
    %v51 = vld [vmem:[#allocation5 + $0x40] sm:$0xff]
    %v52 = vld [vmem:[#allocation5 + $0x48] sm:$0xff]
    %v53 = vld [vmem:[#allocation5 + $0x50] sm:$0xff]
    %v54 = vld [vmem:[#allocation5 + $0x58] sm:$0xff]
    %v55 = vld [vmem:[#allocation5 + $0x60] sm:$0xff]
    %v56 = vld [vmem:[#allocation5 + $0x68] sm:$0xff]
    %v57 = vld [vmem:[#allocation5 + $0x70] sm:$0xff]
    %v58 = vld [vmem:[#allocation5 + $0x78] sm:$0xff]
    %v59 = vld [vmem:[#allocation5 + $0x80] sm:$0xff]
    %v60 = vld [vmem:[#allocation5 + $0x88] sm:$0xff]
    %v61 = vld [vmem:[#allocation5 + $0x90] sm:$0x1]
    %v62 = vld [vmem:[#allocation5 + $0x91] sm:$0x1]
    %v63 = vld [vmem:[#allocation5 + $0x92] sm:$0x1]
    %v64 = vld [vmem:[#allocation5 + $0x93] sm:$0x1]
    %v65 = vld [vmem:[#allocation2] sm:$0xff]
    %v66 = vpack.c.bf16 %v65, %v65
    %v67 = vpack.c.bf16 %v44, %v43
    %v68 = vperm.slane %v61, 0
    %vm69 = vcmask 130048
    %v71 = vsel %vm69, %v66, 0
    %73 = vmatpush.bf16.msra.mxu0 0
    %74 = vmatpush.bf16.msra.mxu0 0
    %75 = vmatpush.bf16.msra.mxu0 0
    %76 = vmatpush.bf16.msra.mxu0 0
    %77 = vmatpush.bf16.msra.mxu0 0
    %78 = vmatpush.bf16.msra.mxu0 0
    %79 = vmatpush.bf16.msra.mxu0 0
    %80 = vmatpush.bf16.msra.mxu0 %v67
    %81 = vmatmul.bf16.gmra.mxu0 %v71
    %v82 = vpop.f32.mrf.mxu0
    %v83 = vadd.f32 %v68, %v82
    %v84 = vpop.f32.mrf.mxu0
    %85 = vdwg.mxu0
    %v86 = vmax.f32 %v83, 0.0
    %v87 = vpack.c.bf16 %v86, %v86
    %v88 = vpack.c.bf16 %v46, %v45
    %v89 = vpack.c.bf16 %v48, %v47
    %v90 = vpack.c.bf16 %v50, %v49
    %v91 = vpack.c.bf16 %v52, %v51
    %v92 = vpack.c.bf16 %v54, %v53
    %v93 = vpack.c.bf16 %v56, %v55
    %v94 = vpack.c.bf16 %v58, %v57
    %v95 = vpack.c.bf16 %v60, %v59
    %v96 = vperm.slane %v62, 0
    %97 = vmatpush.bf16.msra.mxu0 %v95
    %98 = vmatpush.bf16.msra.mxu0 %v94
    %99 = vmatpush.bf16.msra.mxu0 %v93
    %100 = vmatpush.bf16.msra.mxu0 %v92
    %101 = vmatpush.bf16.msra.mxu0 %v91
    %102 = vmatpush.bf16.msra.mxu0 %v90
    %103 = vmatpush.bf16.msra.mxu0 %v89
    %104 = vmatpush.bf16.msra.mxu0 %v88
    %105 = vmatmul.bf16.gmra.mxu0 %v87
    %v106 = vpop.f32.mrf.mxu0
    %v107 = vadd.f32 %v96, %v106
    %v108 = vpop.f32.mrf.mxu0
    %109 = vdwg.mxu0
    %v110 = vmax.f32 %v107, 0.0
    %v111 = vpack.c.bf16 %v63, %v63
    %v112 = vpack.c.bf16 %v110, %v110
    %114 = vset.pattern.permute.xlu0 0
    %115 = vperm.xlu0 %114, %v64
    %v116 = vpop.permute.xlu0 %115
    %118 = vmatpush.bf16.xpose.msra.mxu0 0
    %119 = vmatpush.bf16.xpose.msra.mxu0 0
    %120 = vmatpush.bf16.xpose.msra.mxu0 0
    %121 = vmatpush.bf16.xpose.msra.mxu0 0
    %122 = vmatpush.bf16.xpose.msra.mxu0 0
    %123 = vmatpush.bf16.xpose.msra.mxu0 0
    %124 = vmatpush.bf16.xpose.msra.mxu0 0
    %125 = vmatpush.bf16.xpose.msra.mxu0 %v112
    %126 = vmatmul.bf16.gmra.mxu0 %v111
    %v127 = vpop.f32.mrf.mxu0
    %v128 = vadd.f32 %v116, %v127
    %v129 = vpop.f32.mrf.mxu0
    %130 = vdwg.mxu0
    %vm131 = vcmask 57344
    %132 = vst.msk [vmem:[#allocation7] sm:$0x1] %vm131, %v128
    // Predicated region
    $region18: #{tpu_custom_call.1} parent=1 // pred_check
      _
    $region19: #{tpu_custom_call.1} parent=1 // pred_check_branch
      %134 = sbr.rel (0) target = $region21
    $region20: #{tpu_custom_call.1} parent=1 // pred_region
      %136 = vsyncadd [#allocation4], 0
      %s138 = sshll.u32 [#allocation7], 4
      %s139 = int_to_ptr.vmem [resolvable:$true] %s138
      %s140 = sshll.u32 %s2, 4
      %s141 = int_to_ptr.hbm [resolvable:$true] %s140
      %143 = dma.vmem_to_hbm [thread:$0]  %s139, 16, %s141, [#allocation4]
    $region21: #{tpu_custom_call.1} parent=1 // pred_fallthru
      _
    // Predicated region
    $region22: #{tpu_custom_call.1} parent=1 // pred_check
      _
    $region23: #{tpu_custom_call.1} parent=1 // pred_check_branch
      %145 = sbr.rel (0) target = $region25
    $region24: #{tpu_custom_call.1} parent=1 // pred_region
      %147 = dma.done [#allocation4], 16
    $region25: #{tpu_custom_call.1} parent=1 // pred_fallthru
      _
    %148 = vsyncpa [#allocation3], 1
    %149 = vsyncpa [#allocation6], 1
    %150 = vsyncpa [#allocation4], 1

</llo_original>
